<compile_context>
chip_gen: v7x
topology: tpu7x:2x2x1
jax: 0.10.0
libtpu: 0.0.40
codegen_flags: <defaults>
</compile_context>

<pallas_src>
import jax
import jax.numpy as jnp
from jax.experimental import pallas as pl
from jax.experimental.pallas import tpu as pltpu

_LANE = 128
_SUB = 8
_MAX_LANE_W = 1024      # lane dim: large multiple of 128 -> lane-dense stores
_MAX_BLOCK_ROWS = 512   # 512 x 1024 x 4B = 2 MiB tile


def _choose_layout(total):
    """Pick (lane_w, block_rows, padded_rows) for a lane-dense 2D slab."""
    lane_w = _MAX_LANE_W
    while lane_w > _LANE and total < lane_w * _SUB:
        lane_w //= 2
    rows_needed = max(1, -(-total // lane_w))

    block_rows = -(-rows_needed // _SUB) * _SUB            # round up to mult of 8
    block_rows = min(_MAX_BLOCK_ROWS, block_rows)

    # Prefer >=2 grid steps when there is enough work, so the parallel grid
    # axis can shard across v7x's 2 TensorCores (no-op on v5e/v6e).
    if rows_needed >= 2 * _SUB:
        half = (rows_needed // 2 // _SUB) * _SUB
        block_rows = min(block_rows, max(_SUB, half))

    padded_rows = -(-rows_needed // block_rows) * block_rows
    return lane_w, block_rows, padded_rows


def damped_oscillation_forward(z, dt, alpha=0.5, beta=0.5):
    """z: float array (B, C, H, W) with C >= 2. Returns y_hat of shape (B, 1, H, W)."""
    # TODO(synk): alpha/beta are trainable nn.Parameters in torch; here they are
    # trace-time scalars (forward semantics only, no gradient path).
    y0 = z[:, 0:1]
    y1 = z[:, 1:2]
    out_shape = y1.shape
    dtype = z.dtype
    total = y1.size

    # Fold scalar constants at trace time.
    c1 = float(dt) * float(beta)                  # dt * beta
    c2 = float(dt) * float(dt) * float(alpha)     # dt^2 * alpha

    lane_w, block_rows, padded_rows = _choose_layout(total)
    padded_total = padded_rows * lane_w

    def to_slab(a):
        flat = a.reshape(-1)
        if padded_total != total:
            flat = jnp.pad(flat, (0, padded_total - total))
        return flat.reshape(padded_rows, lane_w)

    y0s = to_slab(y0)
    y1s = to_slab(y1)

    def kernel(y0_ref, y1_ref, o_ref):
        a = y0_ref[...]
        b = y1_ref[...]
        dy = b - a
        o_ref[...] = b + dy - (c1 * dy + c2 * b)

    grid = (padded_rows // block_rows,)
    out2d = pl.pallas_call(
        kernel,
        out_shape=jax.ShapeDtypeStruct((padded_rows, lane_w), dtype),
        grid_spec=pl.GridSpec(
            grid=grid,
            in_specs=[
                pl.BlockSpec((block_rows, lane_w), lambda i: (i, 0)),
                pl.BlockSpec((block_rows, lane_w), lambda i: (i, 0)),
            ],
            out_specs=pl.BlockSpec((block_rows, lane_w), lambda i: (i, 0)),
        ),
        compiler_params=pltpu.CompilerParams(
            dimension_semantics=("parallel",),
        ),
    )(y0s, y1s)

    out_flat = out2d.reshape(-1)
    if padded_total != total:
        out_flat = out_flat[:total]
    return out_flat.reshape(out_shape)


if __name__ == "__main__":
    key = jax.random.PRNGKey(0)
    # Small NCHW state tensor; module needs C >= 2 (uses channels 0 and 1).
    x = jax.random.normal(key, (2, 4, 16, 16), dtype=jnp.float32)
    dt = 0.1
    alpha = 0.5   # torch defaults (init_phys=None)
    beta = 0.5

    y = damped_oscillation_forward(x, dt, alpha, beta)
    y = jax.block_until_ready(y)

    # Reference check (same semantics as the torch forward).
    y0 = x[:, 0:1]
    y1 = x[:, 1:2]
    y_ref = y1 + (y1 - y0) - dt * (beta * (y1 - y0) + dt * alpha * y1)

    assert y.shape == y_ref.shape
    assert jnp.allclose(y, y_ref, atol=1e-6, rtol=1e-6)
    print("KERNEL_OK")
</pallas_src>

<mosaic_0001>
module attributes {stable_mosaic.version = 11 : i64} {
  func.func @kernel(%arg0: i32, %arg1: memref<8x128xf32, #tpu.memory_space<vmem>>, %arg2: memref<8x128xf32, #tpu.memory_space<vmem>>, %arg3: memref<8x128xf32, #tpu.memory_space<vmem>>) attributes {dimension_semantics = [#tpu.dimension_semantics<parallel>], iteration_bounds = array<i64: 1>, scalar_prefetch = 0 : i64, scratch_operands = 0 : i64, tpu.core_type = #tpu.core_type<tc>, window_params = [{transform_indices = @transform_0, window_bounds = array<i64: 8, 128>}, {transform_indices = @transform_1, window_bounds = array<i64: 8, 128>}, {transform_indices = @transform_2, window_bounds = array<i64: 8, 128>}]} {
    %c0 = arith.constant 0 : index
    %c0_0 = arith.constant 0 : index
    %0 = vector.load %arg1[%c0, %c0_0] : memref<8x128xf32, #tpu.memory_space<vmem>>, vector<8x128xf32>
    %c0_1 = arith.constant 0 : index
    %c0_2 = arith.constant 0 : index
    %1 = vector.load %arg2[%c0_1, %c0_2] : memref<8x128xf32, #tpu.memory_space<vmem>>, vector<8x128xf32>
    %2 = arith.subf %1, %0 : vector<8x128xf32>
    %3 = arith.addf %1, %2 : vector<8x128xf32>
    %cst = arith.constant 5.000000e-02 : f32
    %4 = vector.broadcast %cst : f32 to vector<8x128xf32>
    %5 = arith.mulf %4, %2 : vector<8x128xf32>
    %cst_3 = arith.constant 5.000000e-03 : f32
    %6 = vector.broadcast %cst_3 : f32 to vector<8x128xf32>
    %7 = arith.mulf %6, %1 : vector<8x128xf32>
    %8 = arith.addf %5, %7 : vector<8x128xf32>
    %9 = arith.subf %3, %8 : vector<8x128xf32>
    %c0_4 = arith.constant 0 : index
    %c0_5 = arith.constant 0 : index
    %10 = vector.load %arg3[%c0_4, %c0_5] : memref<8x128xf32, #tpu.memory_space<vmem>>, vector<8x128xf32>
    tpu.vector_store %arg3[%c0_4, %c0_5], %9 {strides = array<i32>} : memref<8x128xf32, #tpu.memory_space<vmem>>, vector<8x128xf32>,
    return
  }
  func.func @transform_0(%arg0: i32) -> (i32, i32) {
    %c0_i32 = arith.constant 0 : i32
    %c0_i32_0 = arith.constant 0 : i32
    return %arg0, %c0_i32 : i32, i32
  }
  func.func @transform_1(%arg0: i32) -> (i32, i32) {
    %c0_i32 = arith.constant 0 : i32
    %c0_i32_0 = arith.constant 0 : i32
    return %arg0, %c0_i32 : i32, i32
  }
  func.func @transform_2(%arg0: i32) -> (i32, i32) {
    %c0_i32 = arith.constant 0 : i32
    %c0_i32_0 = arith.constant 0 : i32
    return %arg0, %c0_i32 : i32, i32
  }
}

</mosaic_0001>

<llo_original>
// kernel: tpu_custom_call.1
$region0: #{tpu_custom_call.1}
  #allocation0 [shape = 'u32[]', space=smem, size = 0x4, offset = 0x4, fixed_abs, tag = 'smem constant byte address 0x4 - core index']
  #allocation1 [shape = 'u32[144,128]{1,0:T(1,128)}', space=vmem, size = 0x12000, scoped, tag = 'internal scratch']
  %s0 = inlined_call_operand.hbm [shape: f32[8,128], index: 0, kind: input, shape index: {}]
  %s1 = inlined_call_operand.hbm [shape: f32[8,128], index: 1, kind: input, shape index: {}]
  %s2 = inlined_call_operand.hbm [shape: f32[8,128], index: 2, kind: output, shape index: {}]
  %s3 = sld [smem:[#allocation0]]
  $region26: #{tpu_custom_call.1} parent=0
    _
  %s5 = ssub.s32 1, %s3
  %s6 = scalar_select 0, %s5, %s3
  $region1: #{tpu_custom_call.1} parent=0
    #allocation2 [shape = 'u8[4096]{0}', space=vmem, size = 0x1000, scoped, tag = 'input window, operand 0, single buffered']
    #allocation3 [shape = 's32[1]{0}', space=sflag, size = 0x4, scoped, tag = 'scoped memory for tpu_custom_call.1']
    #allocation4 [shape = 's32[1]{0}', space=sflag, size = 0x4, scoped, tag = 'scoped memory for tpu_custom_call.1']
    #allocation5 [shape = 'u8[4096]{0}', space=vmem, size = 0x1000, scoped, tag = 'input window, operand 1, single buffered']
    #allocation6 [shape = 's32[1]{0}', space=sflag, size = 0x4, scoped, tag = 'scoped memory for tpu_custom_call.1']
    #allocation7 [shape = 'u8[4096]{0}', space=vmem, size = 0x1000, scoped, tag = 'output window, operand 0, single buffered']
    %7 = vsyncpa [#allocation3], 0
    %8 = vsyncpa [#allocation6], 0
    %9 = vsyncpa [#allocation4], 0
    // Predicated region
    $region2: #{tpu_custom_call.1} parent=1 // pred_check
      _
    $region3: #{tpu_custom_call.1} parent=1 // pred_check_branch
      %11 = sbr.rel (0) target = $region5
    $region4: #{tpu_custom_call.1} parent=1 // pred_region
      %s13 = ssub.s32 128, 128
      %14 = vsyncadd [#allocation3], %s13
      %s16 = sshll.u32 [#allocation2], 4
      %s17 = int_to_ptr.vmem [resolvable:$true] %s16
      %19 = dma.hbm_to_vmem [thread:$0]  %s0, 128, %s17, [#allocation3]
    $region5: #{tpu_custom_call.1} parent=1 // pred_fallthru
      _
    // Predicated region
    $region6: #{tpu_custom_call.1} parent=1 // pred_check
      _
    $region7: #{tpu_custom_call.1} parent=1 // pred_check_branch
      %21 = sbr.rel (0) target = $region9
    $region8: #{tpu_custom_call.1} parent=1 // pred_region
      %s23 = ssub.s32 128, 128
      %24 = vsyncadd [#allocation6], %s23
      %s26 = sshll.u32 [#allocation5], 4
      %s27 = int_to_ptr.vmem [resolvable:$true] %s26
      %29 = dma.hbm_to_vmem [thread:$0]  %s1, 128, %s27, [#allocation6]
    $region9: #{tpu_custom_call.1} parent=1 // pred_fallthru
      _
    // Predicated region
    $region10: #{tpu_custom_call.1} parent=1 // pred_check
      _
    $region11: #{tpu_custom_call.1} parent=1 // pred_check_branch
      %31 = sbr.rel (0) target = $region13
    $region12: #{tpu_custom_call.1} parent=1 // pred_region
      %32 = dma.done [#allocation3], 128
    $region13: #{tpu_custom_call.1} parent=1 // pred_fallthru
      _
    // Predicated region
    $region14: #{tpu_custom_call.1} parent=1 // pred_check
      _
    $region15: #{tpu_custom_call.1} parent=1 // pred_check_branch
      %34 = sbr.rel (0) target = $region17
    $region16: #{tpu_custom_call.1} parent=1 // pred_region
      %35 = dma.done [#allocation6], 128
    $region17: #{tpu_custom_call.1} parent=1 // pred_fallthru
      _
    %v36 = vld [vmem:[#allocation2] sm:$0xff]
    %v37 = vld [vmem:[#allocation5] sm:$0xff]
    %v38 = vsub.f32 %v37, %v36
    %v39 = vadd.f32 %v37, %v38
    %v40 = vmul.f32 %v38, 0.05
    %v41 = vmul.f32 %v37, 0.005
    %v42 = vadd.f32 %v40, %v41
    %v43 = vsub.f32 %v39, %v42
    %44 = vst [vmem:[#allocation7] sm:$0xff] %v43
    // Predicated region
    $region18: #{tpu_custom_call.1} parent=1 // pred_check
      _
    $region19: #{tpu_custom_call.1} parent=1 // pred_check_branch
      %46 = sbr.rel (0) target = $region21
    $region20: #{tpu_custom_call.1} parent=1 // pred_region
      %s48 = ssub.s32 128, 128
      %49 = vsyncadd [#allocation4], %s48
      %s51 = sshll.u32 [#allocation7], 4
      %s52 = int_to_ptr.vmem [resolvable:$true] %s51
      %54 = dma.vmem_to_hbm [thread:$0]  %s52, 128, %s2, [#allocation4]
    $region21: #{tpu_custom_call.1} parent=1 // pred_fallthru
      _
    // Predicated region
    $region22: #{tpu_custom_call.1} parent=1 // pred_check
      _
    $region23: #{tpu_custom_call.1} parent=1 // pred_check_branch
      %56 = sbr.rel (0) target = $region25
    $region24: #{tpu_custom_call.1} parent=1 // pred_region
      %57 = dma.done [#allocation4], 128
    $region25: #{tpu_custom_call.1} parent=1 // pred_fallthru
      _
    %58 = vsyncpa [#allocation3], 1
    %59 = vsyncpa [#allocation6], 1
    %60 = vsyncpa [#allocation4], 1

</llo_original>
